<compile_context>
chip_gen: v6e
topology: v6e:2x2x1
jax: 0.10.0
libtpu: 0.0.40
codegen_flags: <defaults>
</compile_context>

<pallas_src>
import functools

import jax
import jax.numpy as jnp
from jax import lax
from jax.experimental import pallas as pl
from jax.experimental.pallas import tpu as pltpu


# -----------------------------------------------------------------------------
# Shared in-kernel helper: one time step of a stacked LSTM.
#   h_ref / c_ref : [n_layers, B, H] VMEM refs (carried across grid steps)
#   w_ref         : [n_layers, P + H, 4H]  packed [w_ih ; zero-pad ; w_hh], pre-transposed
#   b_ref         : [n_layers, 1, 4H]      b_ih + b_hh pre-summed
# Returns the top layer's new hidden state.
# -----------------------------------------------------------------------------
def _lstm_stack_step(x, h_ref, c_ref, w_ref, b_ref, n_layers, hid_dim, pad_in):
    H = hid_dim
    B = x.shape[0]
    # Full-vreg activation: tanh on the g-gate lanes, sigmoid on i/f/o lanes.
    gate_iota = lax.broadcasted_iota(jnp.int32, (B, 4 * H), 1)
    is_g = (gate_iota >= 2 * H) & (gate_iota < 3 * H)

    for l in range(n_layers):                      # static, unrolled
        if x.shape[1] < pad_in:                    # only if emb_dim != hid_dim
            x = jnp.pad(x, ((0, 0), (0, pad_in - x.shape[1])))
        h_prev = h_ref[l]                          # [B, H]
        c_prev = c_ref[l]                          # [B, H]
        xin = jnp.concatenate([x, h_prev], axis=1)                        # [B, P+H]
        gates = jnp.dot(xin, w_ref[l],
                        preferred_element_type=jnp.float32) + b_ref[l]    # [B, 4H]
        act = jnp.where(is_g, jnp.tanh(gates), jax.nn.sigmoid(gates))
        i_g = act[:, 0:H]
        f_g = act[:, H:2 * H]
        g_g = act[:, 2 * H:3 * H]
        o_g = act[:, 3 * H:4 * H]
        c_new = f_g * c_prev + i_g * g_g
        h_new = o_g * jnp.tanh(c_new)
        h_ref[l] = h_new
        c_ref[l] = c_new
        x = h_new
    return x


# -----------------------------------------------------------------------------
# Encoder: LSTM over the whole source sequence in one kernel (grid over time).
# -----------------------------------------------------------------------------
def _encoder_kernel(n_layers, hid_dim, pad_in,
                    x_ref, w_ref, b_ref, h_ref, c_ref):
    t = pl.program_id(0)

    @pl.when(t == 0)
    def _():
        h_ref[...] = jnp.zeros_like(h_ref)
        c_ref[...] = jnp.zeros_like(c_ref)

    _lstm_stack_step(x_ref[0], h_ref, c_ref, w_ref, b_ref,
                     n_layers, hid_dim, pad_in)


def encoder_forward(src_emb, packed, n_layers, hid_dim):
    src_len, batch, emb_dim = src_emb.shape
    L, H = n_layers, hid_dim

    def resident(shape):
        nd = len(shape)
        return pl.BlockSpec(shape, lambda t, _nd=nd: (0,) * _nd)

    kernel = functools.partial(_encoder_kernel, L, H, packed["enc_pad_in"])
    state = jax.ShapeDtypeStruct((L, batch, H), jnp.float32)
    h, c = pl.pallas_call(
        kernel,
        out_shape=(state, state),
        grid=(src_len,),
        in_specs=[
            pl.BlockSpec((1, batch, emb_dim), lambda t: (t, 0, 0)),
            resident(packed["enc_w"].shape),
            resident(packed["enc_b"].shape),
        ],
        out_specs=(resident((L, batch, H)), resident((L, batch, H))),
        compiler_params=pltpu.CompilerParams(
            dimension_semantics=("arbitrary",)),
    )(src_emb, packed["enc_w"], packed["enc_b"])
    return h, c


# -----------------------------------------------------------------------------
# Decoder: the whole greedy / teacher-forced decode loop in one kernel.
# -----------------------------------------------------------------------------
def _decoder_kernel(n_layers, hid_dim, pad_in, output_dim,
                    force_ref,                          # scalar prefetch (SMEM)
                    temb_ref, h0_ref, c0_ref, emb_ref,
                    w_ref, b_ref, fcw_ref, fcb_ref,
                    pred_ref, h_ref, c_ref,             # outputs (h/c are the carry)
                    top1_scr):                          # [B, 1] int32 scratch
    s = pl.program_id(0)
    B = h0_ref.shape[1]
    V = emb_ref.shape[0]
    Opad = fcw_ref.shape[1]

    @pl.when(s == 0)
    def _():
        h_ref[...] = h0_ref[...]
        c_ref[...] = c0_ref[...]
        top1_scr[...] = jnp.zeros_like(top1_scr)

    # ---- this step's input embedding: teacher token vs previous-step argmax --
    vocab_iota = lax.broadcasted_iota(jnp.int32, (B, V), 1)
    onehot = (vocab_iota == top1_scr[...]).astype(jnp.float32)            # [B, V]
    greedy_emb = jnp.dot(onehot, emb_ref[...],
                         preferred_element_type=jnp.float32)              # [B, E]
    f = force_ref[s].astype(jnp.float32)                                  # 0. or 1.
    x = f * temb_ref[0] + (1.0 - f) * greedy_emb

    # ---- stacked LSTM step (updates resident h/c in place) ------------------
    x_top = _lstm_stack_step(x, h_ref, c_ref, w_ref, b_ref,
                             n_layers, hid_dim, pad_in)

    # ---- fc_out, lane-dense padded logits ------------------------------------
    logits = jnp.dot(x_top, fcw_ref[...],
                     preferred_element_type=jnp.float32) + fcb_ref[...]   # [B, Opad]
    pred_ref[0] = logits

    # ---- argmax over valid lanes -> next step's greedy token -----------------
    lane_iota = lax.broadcasted_iota(jnp.int32, (B, Opad), 1)
    masked = jnp.where(lane_iota < output_dim, logits, -1e30)
    rowmax = jnp.max(masked, axis=1, keepdims=True)
    cand = jnp.where(masked == rowmax, lane_iota.astype(jnp.float32), float(Opad))
    top1_scr[...] = jnp.min(cand, axis=1, keepdims=True).astype(jnp.int32)


def decoder_forward(force_flags, teacher_emb, hidden, cell, packed,
                    n_layers, hid_dim, output_dim):
    steps, batch, emb_dim = teacher_emb.shape
    L, H = n_layers, hid_dim
    Opad = packed["fc_w"].shape[1]

    def resident(shape):
        nd = len(shape)
        return pl.BlockSpec(shape, lambda s, f, _nd=nd: (0,) * _nd)

    kernel = functools.partial(_decoder_kernel, L, H, packed["dec_pad_in"],
                               output_dim)
    grid_spec = pltpu.PrefetchScalarGridSpec(
        num_scalar_prefetch=1,
        grid=(steps,),
        in_specs=[
            pl.BlockSpec((1, batch, emb_dim), lambda s, f: (s, 0, 0)),
            resident(hidden.shape),
            resident(cell.shape),
            resident(packed["dec_embedding"].shape),
            resident(packed["dec_w"].shape),
            resident(packed["dec_b"].shape),
            resident(packed["fc_w"].shape),
            resident(packed["fc_b"].shape),
        ],
        out_specs=(
            pl.BlockSpec((1, batch, Opad), lambda s, f: (s, 0, 0)),
            resident((L, batch, H)),
            resident((L, batch, H)),
        ),
        scratch_shapes=[pltpu.VMEM((batch, 1), jnp.int32)],
    )
    pred_pad, h_out, c_out = pl.pallas_call(
        kernel,
        out_shape=(
            jax.ShapeDtypeStruct((steps, batch, Opad), jnp.float32),
            jax.ShapeDtypeStruct((L, batch, H), jnp.float32),
            jax.ShapeDtypeStruct((L, batch, H), jnp.float32),
        ),
        grid_spec=grid_spec,
        compiler_params=pltpu.CompilerParams(
            dimension_semantics=("arbitrary",)),
    )(force_flags, teacher_emb, hidden, cell, packed["dec_embedding"],
      packed["dec_w"], packed["dec_b"], packed["fc_w"], packed["fc_b"])
    return pred_pad, h_out, c_out


# -----------------------------------------------------------------------------
# Full Seq2Seq.forward equivalent (eval mode).
# -----------------------------------------------------------------------------
def seq2seq_forward(src, trg, packed, tf_draws, n_layers, hid_dim, output_dim):
    src_len, batch = src.shape
    trg_len = trg.shape[0]
    steps = trg_len - 1

    # Encoder: bulk embedding gather once per sequence, LSTM loop in Pallas.
    # TODO(synk): nn.Dropout / LSTM inter-layer dropout are identity in eval
    # mode; training-mode stochastic dropout is not implemented.
    src_emb = jnp.take(packed["enc_embedding"], src, axis=0)       # [T_src, B, E]
    hidden, cell = encoder_forward(src_emb, packed, n_layers, hid_dim)

    # Decoder: teacher candidate for grid step s is trg[s]; force flag for step
    # s >= 1 is the draw made at module loop iteration t = s (step 0 always
    # uses trg[0]).
    teacher_emb = jnp.take(packed["dec_embedding"], trg[:steps], axis=0)
    force_flags = jnp.concatenate(
        [jnp.ones((1,), jnp.int32), tf_draws[1:steps].astype(jnp.int32)])

    pred_pad, _, _ = decoder_forward(force_flags, teacher_emb, hidden, cell,
                                     packed, n_layers, hid_dim, output_dim)
    outputs = jnp.concatenate(
        [jnp.zeros((1, batch, output_dim), jnp.float32),
         pred_pad[:, :, :output_dim]], axis=0)                     # outputs[0] = 0
    return outputs


# -----------------------------------------------------------------------------
# One-time weight packing (transposes, fusion, bias pre-sum, fc padding).
# -----------------------------------------------------------------------------
def pack_params(params, n_layers, hid_dim):
    H = hid_dim

    def pack_stack(prefix, emb_dim):
        P = max(emb_dim, H)
        ws, bs = [], []
        for l in range(n_layers):
            in_dim = emb_dim if l == 0 else H
            w = jnp.zeros((P + H, 4 * H), jnp.float32)
            w = w.at[:in_dim, :].set(params[f"{prefix}_w_ih_{l}"].T)
            w = w.at[P:, :].set(params[f"{prefix}_w_hh_{l}"].T)
            ws.append(w)
            bs.append((params[f"{prefix}_b_ih_{l}"]
                       + params[f"{prefix}_b_hh_{l}"]).reshape(1, 4 * H))
        return jnp.stack(ws), jnp.stack(bs), P

    enc_w, enc_b, enc_pad = pack_stack("enc", params["enc_embedding"].shape[1])
    dec_w, dec_b, dec_pad = pack_stack("dec", params["dec_embedding"].shape[1])

    out_dim = params["fc_w"].shape[0]
    o_pad = ((out_dim + 127) // 128) * 128           # lane-dense fc output width
    fc_w = jnp.zeros((H, o_pad), jnp.float32).at[:, :out_dim].set(params["fc_w"].T)
    fc_b = jnp.zeros((1, o_pad), jnp.float32).at[:, :out_dim].set(
        params["fc_b"].reshape(1, -1))

    return dict(enc_embedding=params["enc_embedding"],
                dec_embedding=params["dec_embedding"],
                enc_w=enc_w, enc_b=enc_b, enc_pad_in=enc_pad,
                dec_w=dec_w, dec_b=dec_b, dec_pad_in=dec_pad,
                fc_w=fc_w, fc_b=fc_b)


# -----------------------------------------------------------------------------
# Pure-JAX reference (mirrors the PyTorch Seq2Seq forward exactly, with the
# same precomputed teacher-forcing draws).
# -----------------------------------------------------------------------------
def _lstm_cell_ref(x, h, c, w_ih, w_hh, b_ih, b_hh, H):
    gates = x @ w_ih.T + b_ih + h @ w_hh.T + b_hh
    i = jax.nn.sigmoid(gates[:, :H])
    f = jax.nn.sigmoid(gates[:, H:2 * H])
    g = jnp.tanh(gates[:, 2 * H:3 * H])
    o = jax.nn.sigmoid(gates[:, 3 * H:])
    c_new = f * c + i * g
    h_new = o * jnp.tanh(c_new)
    return h_new, c_new


def seq2seq_ref(src, trg, params, tf_draws, n_layers, hid_dim):
    src_len, batch = src.shape
    trg_len = trg.shape[0]
    V = params["fc_w"].shape[0]
    H = hid_dim
    h = [jnp.zeros((batch, H), jnp.float32) for _ in range(n_layers)]
    c = [jnp.zeros((batch, H), jnp.float32) for _ in range(n_layers)]

    for t in range(src_len):                               # encoder
        x = params["enc_embedding"][src[t]]
        for l in range(n_layers):
            h[l], c[l] = _lstm_cell_ref(
                x, h[l], c[l],
                params[f"enc_w_ih_{l}"], params[f"enc_w_hh_{l}"],
                params[f"enc_b_ih_{l}"], params[f"enc_b_hh_{l}"], H)
            x = h[l]

    outputs = [jnp.zeros((batch, V), jnp.float32)]
    inp = trg[0]
    for t in range(1, trg_len):                            # decoder loop
        x = params["dec_embedding"][inp]
        for l in range(n_layers):
            h[l], c[l] = _lstm_cell_ref(
                x, h[l], c[l],
                params[f"dec_w_ih_{l}"], params[f"dec_w_hh_{l}"],
                params[f"dec_b_ih_{l}"], params[f"dec_b_hh_{l}"], H)
            x = h[l]
        pred = x @ params["fc_w"].T + params["fc_b"]
        outputs.append(pred)
        top1 = jnp.argmax(pred, axis=1).astype(trg.dtype)
        inp = jnp.where(tf_draws[t], trg[t], top1)
    return jnp.stack(outputs)


# -----------------------------------------------------------------------------
# Parameter init
# -----------------------------------------------------------------------------
def init_params(key, input_dim, output_dim, enc_emb, dec_emb, hid_dim, n_layers):
    params = {}
    key, k = jax.random.split(key)
    params["enc_embedding"] = jax.random.normal(k, (input_dim, enc_emb), jnp.float32) * 0.1
    key, k = jax.random.split(key)
    params["dec_embedding"] = jax.random.normal(k, (output_dim, dec_emb), jnp.float32) * 0.1
    for prefix, emb in (("enc", enc_emb), ("dec", dec_emb)):
        for l in range(n_layers):
            in_dim = emb if l == 0 else hid_dim
            key, k1, k2, k3, k4 = jax.random.split(key, 5)
            params[f"{prefix}_w_ih_{l}"] = jax.random.normal(k1, (4 * hid_dim, in_dim), jnp.float32) * 0.1
            params[f"{prefix}_w_hh_{l}"] = jax.random.normal(k2, (4 * hid_dim, hid_dim), jnp.float32) * 0.1
            params[f"{prefix}_b_ih_{l}"] = jax.random.normal(k3, (4 * hid_dim,), jnp.float32) * 0.1
            params[f"{prefix}_b_hh_{l}"] = jax.random.normal(k4, (4 * hid_dim,), jnp.float32) * 0.1
    key, k1, k2 = jax.random.split(key, 3)
    params["fc_w"] = jax.random.normal(k1, (output_dim, hid_dim), jnp.float32) * 0.1
    params["fc_b"] = jax.random.normal(k2, (output_dim,), jnp.float32) * 0.1
    return params


# -----------------------------------------------------------------------------
if __name__ == "__main__":
    INPUT_DIM = 16    # src vocab
    OUTPUT_DIM = 16   # trg (tag) vocab
    ENC_EMB = 32
    DEC_EMB = 32
    HID_DIM = 32
    N_LAYERS = 2
    BATCH = 8
    SRC_LEN = 10
    TRG_LEN = 8
    TEACHER_FORCING_RATIO = 0.5

    key = jax.random.PRNGKey(0)
    key, kp, ks, kt, kf = jax.random.split(key, 5)

    params = init_params(kp, INPUT_DIM, OUTPUT_DIM, ENC_EMB, DEC_EMB, HID_DIM, N_LAYERS)
    src = jax.random.randint(ks, (SRC_LEN, BATCH), 0, INPUT_DIM, dtype=jnp.int32)
    trg = jax.random.randint(kt, (TRG_LEN, BATCH), 0, OUTPUT_DIM, dtype=jnp.int32)
    # TODO(synk): the module draws random.random() on the host per step; we
    # precompute the draws so kernel and reference see identical decisions.
    tf_draws = jax.random.uniform(kf, (TRG_LEN,)) < TEACHER_FORCING_RATIO

    packed = pack_params(params, N_LAYERS, HID_DIM)   # one-time packing

    outputs = seq2seq_forward(src, trg, packed, tf_draws,
                              N_LAYERS, HID_DIM, OUTPUT_DIM)
    jax.block_until_ready(outputs)

    outputs_ref = seq2seq_ref(src, trg, params, tf_draws, N_LAYERS, HID_DIM)
    assert outputs.shape == outputs_ref.shape, (outputs.shape, outputs_ref.shape)
    max_diff = float(jnp.max(jnp.abs(outputs - outputs_ref)))
    assert jnp.allclose(outputs, outputs_ref, atol=1e-3, rtol=1e-3), \
        f"outputs mismatch, max abs diff = {max_diff}"

    print("KERNEL_OK")
</pallas_src>

<mosaic_0001>
module attributes {stable_mosaic.version = 11 : i64} {
  func.func @_encoder_kernel(%arg0: i32, %arg1: memref<1x8x32xf32, #tpu.memory_space<vmem>>, %arg2: memref<2x64x128xf32, #tpu.memory_space<vmem>>, %arg3: memref<2x1x128xf32, #tpu.memory_space<vmem>>, %arg4: memref<2x8x32xf32, #tpu.memory_space<vmem>>, %arg5: memref<2x8x32xf32, #tpu.memory_space<vmem>>) attributes {dimension_semantics = [#tpu.dimension_semantics<arbitrary>], iteration_bounds = array<i64: 10>, scalar_prefetch = 0 : i64, scratch_operands = 0 : i64, tpu.core_type = #tpu.core_type<tc>, window_params = [{transform_indices = @transform_0, window_bounds = array<i64: 1, 8, 32>}, {pipeline_mode = #tpu.pipeline_mode<synchronous>, transform_indices = @transform_1, window_bounds = array<i64: 2, 64, 128>}, {pipeline_mode = #tpu.pipeline_mode<synchronous>, transform_indices = @transform_2, window_bounds = array<i64: 2, 1, 128>}, {pipeline_mode = #tpu.pipeline_mode<synchronous>, transform_indices = @transform_3, window_bounds = array<i64: 2, 8, 32>}, {pipeline_mode = #tpu.pipeline_mode<synchronous>, transform_indices = @transform_4, window_bounds = array<i64: 2, 8, 32>}]} {
    %c0_i32 = arith.constant 0 : i32
    %0 = arith.cmpi eq, %arg0, %c0_i32 : i32
    %1 = arith.extui %0 : i1 to i32
    %c0_i32_0 = arith.constant 0 : i32
    %2 = arith.cmpi ne, %1, %c0_i32_0 : i32
    scf.if %2 {
      %cst_41 = arith.constant 0.000000e+00 : f32
      %79 = vector.broadcast %cst_41 : f32 to vector<2x8x32xf32>
      %c0_42 = arith.constant 0 : index
      %c0_43 = arith.constant 0 : index
      %c0_44 = arith.constant 0 : index
      %80 = vector.load %arg4[%c0_42, %c0_43, %c0_44] : memref<2x8x32xf32, #tpu.memory_space<vmem>>, vector<2x8x32xf32>
      tpu.vector_store %arg4[%c0_42, %c0_43, %c0_44], %79 {strides = array<i32>} : memref<2x8x32xf32, #tpu.memory_space<vmem>>, vector<2x8x32xf32>,
      %cst_45 = arith.constant 0.000000e+00 : f32
      %81 = vector.broadcast %cst_45 : f32 to vector<2x8x32xf32>
      %c0_46 = arith.constant 0 : index
      %c0_47 = arith.constant 0 : index
      %c0_48 = arith.constant 0 : index
      %82 = vector.load %arg5[%c0_46, %c0_47, %c0_48] : memref<2x8x32xf32, #tpu.memory_space<vmem>>, vector<2x8x32xf32>
      tpu.vector_store %arg5[%c0_46, %c0_47, %c0_48], %81 {strides = array<i32>} : memref<2x8x32xf32, #tpu.memory_space<vmem>>, vector<2x8x32xf32>,
    } else {
    }
    %c0 = arith.constant 0 : index
    %c0_1 = arith.constant 0 : index
    %c0_2 = arith.constant 0 : index
    %3 = vector.load %arg1[%c0, %c0_1, %c0_2] : memref<1x8x32xf32, #tpu.memory_space<vmem>>, vector<1x8x32xf32>
    %4 = vector.shape_cast %3 : vector<1x8x32xf32> to vector<8x32xf32>
    %5 = tpu.iota {dimensions = array<i32: 1>} : vector<8x128xi32>
    %c64_i32 = arith.constant 64 : i32
    %6 = vector.broadcast %c64_i32 : i32 to vector<8x128xi32>
    %7 = arith.cmpi sge, %5, %6 : vector<8x128xi32>
    %c96_i32 = arith.constant 96 : i32
    %8 = vector.broadcast %c96_i32 : i32 to vector<8x128xi32>
    %9 = arith.cmpi slt, %5, %8 : vector<8x128xi32>
    %10 = arith.andi %7, %9 : vector<8x128xi1>
    %c0_3 = arith.constant 0 : index
    %c0_4 = arith.constant 0 : index
    %c0_5 = arith.constant 0 : index
    %11 = vector.load %arg4[%c0_3, %c0_4, %c0_5] : memref<2x8x32xf32, #tpu.memory_space<vmem>>, vector<1x8x32xf32>
    %12 = vector.shape_cast %11 : vector<1x8x32xf32> to vector<8x32xf32>
    %c0_6 = arith.constant 0 : index
    %c0_7 = arith.constant 0 : index
    %c0_8 = arith.constant 0 : index
    %13 = vector.load %arg5[%c0_6, %c0_7, %c0_8] : memref<2x8x32xf32, #tpu.memory_space<vmem>>, vector<1x8x32xf32>
    %14 = vector.shape_cast %13 : vector<1x8x32xf32> to vector<8x32xf32>
    %15 = tpu.concatenate %4, %12 in 1 : vector<8x32xf32>, vector<8x32xf32> -> vector<8x64xf32>
    %c0_9 = arith.constant 0 : index
    %c0_10 = arith.constant 0 : index
    %c0_11 = arith.constant 0 : index
    %16 = vector.load %arg2[%c0_9, %c0_10, %c0_11] : memref<2x64x128xf32, #tpu.memory_space<vmem>>, vector<1x64x128xf32>
    %17 = vector.shape_cast %16 : vector<1x64x128xf32> to vector<64x128xf32>
    %cst = arith.constant dense<0.000000e+00> : vector<8x128xf32>
    %18 = tpu.matmul %15, %17, %cst {dimension_numbers = #tpu.dot_dimension_numbers<[1], [0], [0], [1], [0, 0, 1, 1], [], []>} : vector<8x64xf32>, vector<64x128xf32>, vector<8x128xf32> -> vector<8x128xf32>
    %c0_12 = arith.constant 0 : index
    %c0_13 = arith.constant 0 : index
    %c0_14 = arith.constant 0 : index
    %19 = vector.load %arg3[%c0_12, %c0_13, %c0_14] : memref<2x1x128xf32, #tpu.memory_space<vmem>>, vector<1x1x128xf32>
    %20 = vector.shape_cast %19 : vector<1x1x128xf32> to vector<1x128xf32>
    %21 = vector.broadcast %20 : vector<1x128xf32> to vector<8x128xf32>
    %22 = arith.addf %18, %21 : vector<8x128xf32>
    %23 = math.tanh %22 : vector<8x128xf32>
    %24 = arith.negf %22 : vector<8x128xf32>
    %25 = math.exp %24 : vector<8x128xf32>
    %cst_15 = arith.constant 1.000000e+00 : f32
    %26 = vector.broadcast %cst_15 : f32 to vector<8x128xf32>
    %27 = arith.addf %26, %25 : vector<8x128xf32>
    %28 = arith.divf %26, %27 : vector<8x128xf32>
    %29 = arith.select %10, %23, %28 : vector<8x128xi1>, vector<8x128xf32>
    %30 = vector.extract_strided_slice %29 {offsets = [0, 0], sizes = [8, 32], strides = [1, 1]} : vector<8x128xf32> to vector<8x32xf32>
    %31 = vector.extract_strided_slice %29 {offsets = [0, 32], sizes = [8, 32], strides = [1, 1]} : vector<8x128xf32> to vector<8x32xf32>
    %32 = vector.extract_strided_slice %29 {offsets = [0, 64], sizes = [8, 32], strides = [1, 1]} : vector<8x128xf32> to vector<8x32xf32>
    %33 = vector.extract_strided_slice %29 {offsets = [0, 96], sizes = [8, 32], strides = [1, 1]} : vector<8x128xf32> to vector<8x32xf32>
    %34 = arith.mulf %31, %14 : vector<8x32xf32>
    %35 = arith.mulf %30, %32 : vector<8x32xf32>
    %36 = arith.addf %34, %35 : vector<8x32xf32>
    %37 = math.tanh %36 : vector<8x32xf32>
    %38 = arith.mulf %33, %37 : vector<8x32xf32>
    %c0_16 = arith.constant 0 : index
    %c0_17 = arith.constant 0 : index
    %c0_18 = arith.constant 0 : index
    %39 = vector.load %arg4[%c0_16, %c0_17, %c0_18] : memref<2x8x32xf32, #tpu.memory_space<vmem>>, vector<1x8x32xf32>
    %40 = vector.shape_cast %39 : vector<1x8x32xf32> to vector<8x32xf32>
    %41 = vector.shape_cast %38 : vector<8x32xf32> to vector<1x8x32xf32>
    tpu.vector_store %arg4[%c0_16, %c0_17, %c0_18], %41 {strides = array<i32>} : memref<2x8x32xf32, #tpu.memory_space<vmem>>, vector<1x8x32xf32>,
    %c0_19 = arith.constant 0 : index
    %c0_20 = arith.constant 0 : index
    %c0_21 = arith.constant 0 : index
    %42 = vector.load %arg5[%c0_19, %c0_20, %c0_21] : memref<2x8x32xf32, #tpu.memory_space<vmem>>, vector<1x8x32xf32>
    %43 = vector.shape_cast %42 : vector<1x8x32xf32> to vector<8x32xf32>
    %44 = vector.shape_cast %36 : vector<8x32xf32> to vector<1x8x32xf32>
    tpu.vector_store %arg5[%c0_19, %c0_20, %c0_21], %44 {strides = array<i32>} : memref<2x8x32xf32, #tpu.memory_space<vmem>>, vector<1x8x32xf32>,
    %c1 = arith.constant 1 : index
    %c0_22 = arith.constant 0 : index
    %c0_23 = arith.constant 0 : index
    %45 = vector.load %arg4[%c1, %c0_22, %c0_23] : memref<2x8x32xf32, #tpu.memory_space<vmem>>, vector<1x8x32xf32>
    %46 = vector.shape_cast %45 : vector<1x8x32xf32> to vector<8x32xf32>
    %c1_24 = arith.constant 1 : index
    %c0_25 = arith.constant 0 : index
    %c0_26 = arith.constant 0 : index
    %47 = vector.load %arg5[%c1_24, %c0_25, %c0_26] : memref<2x8x32xf32, #tpu.memory_space<vmem>>, vector<1x8x32xf32>
    %48 = vector.shape_cast %47 : vector<1x8x32xf32> to vector<8x32xf32>
    %49 = tpu.concatenate %38, %46 in 1 : vector<8x32xf32>, vector<8x32xf32> -> vector<8x64xf32>
    %c1_27 = arith.constant 1 : index
    %c0_28 = arith.constant 0 : index
    %c0_29 = arith.constant 0 : index
    %50 = vector.load %arg2[%c1_27, %c0_28, %c0_29] : memref<2x64x128xf32, #tpu.memory_space<vmem>>, vector<1x64x128xf32>
    %51 = vector.shape_cast %50 : vector<1x64x128xf32> to vector<64x128xf32>
    %cst_30 = arith.constant dense<0.000000e+00> : vector<8x128xf32>
    %52 = tpu.matmul %49, %51, %cst_30 {dimension_numbers = #tpu.dot_dimension_numbers<[1], [0], [0], [1], [0, 0, 1, 1], [], []>} : vector<8x64xf32>, vector<64x128xf32>, vector<8x128xf32> -> vector<8x128xf32>
    %c1_31 = arith.constant 1 : index
    %c0_32 = arith.constant 0 : index
    %c0_33 = arith.constant 0 : index
    %53 = vector.load %arg3[%c1_31, %c0_32, %c0_33] : memref<2x1x128xf32, #tpu.memory_space<vmem>>, vector<1x1x128xf32>
    %54 = vector.shape_cast %53 : vector<1x1x128xf32> to vector<1x128xf32>
    %55 = vector.broadcast %54 : vector<1x128xf32> to vector<8x128xf32>
    %56 = arith.addf %52, %55 : vector<8x128xf32>
    %57 = math.tanh %56 : vector<8x128xf32>
    %58 = arith.negf %56 : vector<8x128xf32>
    %59 = math.exp %58 : vector<8x128xf32>
    %cst_34 = arith.constant 1.000000e+00 : f32
    %60 = vector.broadcast %cst_34 : f32 to vector<8x128xf32>
    %61 = arith.addf %60, %59 : vector<8x128xf32>
    %62 = arith.divf %60, %61 : vector<8x128xf32>
    %63 = arith.select %10, %57, %62 : vector<8x128xi1>, vector<8x128xf32>
    %64 = vector.extract_strided_slice %63 {offsets = [0, 0], sizes = [8, 32], strides = [1, 1]} : vector<8x128xf32> to vector<8x32xf32>
    %65 = vector.extract_strided_slice %63 {offsets = [0, 32], sizes = [8, 32], strides = [1, 1]} : vector<8x128xf32> to vector<8x32xf32>
    %66 = vector.extract_strided_slice %63 {offsets = [0, 64], sizes = [8, 32], strides = [1, 1]} : vector<8x128xf32> to vector<8x32xf32>
    %67 = vector.extract_strided_slice %63 {offsets = [0, 96], sizes = [8, 32], strides = [1, 1]} : vector<8x128xf32> to vector<8x32xf32>
    %68 = arith.mulf %65, %48 : vector<8x32xf32>
    %69 = arith.mulf %64, %66 : vector<8x32xf32>
    %70 = arith.addf %68, %69 : vector<8x32xf32>
    %71 = math.tanh %70 : vector<8x32xf32>
    %72 = arith.mulf %67, %71 : vector<8x32xf32>
    %c1_35 = arith.constant 1 : index
    %c0_36 = arith.constant 0 : index
    %c0_37 = arith.constant 0 : index
    %73 = vector.load %arg4[%c1_35, %c0_36, %c0_37] : memref<2x8x32xf32, #tpu.memory_space<vmem>>, vector<1x8x32xf32>
    %74 = vector.shape_cast %73 : vector<1x8x32xf32> to vector<8x32xf32>
    %75 = vector.shape_cast %72 : vector<8x32xf32> to vector<1x8x32xf32>
    tpu.vector_store %arg4[%c1_35, %c0_36, %c0_37], %75 {strides = array<i32>} : memref<2x8x32xf32, #tpu.memory_space<vmem>>, vector<1x8x32xf32>,
    %c1_38 = arith.constant 1 : index
    %c0_39 = arith.constant 0 : index
    %c0_40 = arith.constant 0 : index
    %76 = vector.load %arg5[%c1_38, %c0_39, %c0_40] : memref<2x8x32xf32, #tpu.memory_space<vmem>>, vector<1x8x32xf32>
    %77 = vector.shape_cast %76 : vector<1x8x32xf32> to vector<8x32xf32>
    %78 = vector.shape_cast %70 : vector<8x32xf32> to vector<1x8x32xf32>
    tpu.vector_store %arg5[%c1_38, %c0_39, %c0_40], %78 {strides = array<i32>} : memref<2x8x32xf32, #tpu.memory_space<vmem>>, vector<1x8x32xf32>,
    return
  }
  func.func @transform_0(%arg0: i32) -> (i32, i32, i32) {
    %c0_i32 = arith.constant 0 : i32
    %c0_i32_0 = arith.constant 0 : i32
    %c0_i32_1 = arith.constant 0 : i32
    return %arg0, %c0_i32, %c0_i32_0 : i32, i32, i32
  }
  func.func @transform_1(%arg0: i32) -> (i32, i32, i32) {
    %c0_i32 = arith.constant 0 : i32
    %c0_i32_0 = arith.constant 0 : i32
    %c0_i32_1 = arith.constant 0 : i32
    %c0_i32_2 = arith.constant 0 : i32
    return %c0_i32, %c0_i32_0, %c0_i32_1 : i32, i32, i32
  }
  func.func @transform_2(%arg0: i32) -> (i32, i32, i32) {
    %c0_i32 = arith.constant 0 : i32
    %c0_i32_0 = arith.constant 0 : i32
    %c0_i32_1 = arith.constant 0 : i32
    %c0_i32_2 = arith.constant 0 : i32
    return %c0_i32, %c0_i32_0, %c0_i32_1 : i32, i32, i32
  }
  func.func @transform_3(%arg0: i32) -> (i32, i32, i32) {
    %c0_i32 = arith.constant 0 : i32
    %c0_i32_0 = arith.constant 0 : i32
    %c0_i32_1 = arith.constant 0 : i32
    %c0_i32_2 = arith.constant 0 : i32
    return %c0_i32, %c0_i32_0, %c0_i32_1 : i32, i32, i32
  }
  func.func @transform_4(%arg0: i32) -> (i32, i32, i32) {
    %c0_i32 = arith.constant 0 : i32
    %c0_i32_0 = arith.constant 0 : i32
    %c0_i32_1 = arith.constant 0 : i32
    %c0_i32_2 = arith.constant 0 : i32
    return %c0_i32, %c0_i32_0, %c0_i32_1 : i32, i32, i32
  }
}

</mosaic_0001>

<llo_original>
// kernel: tpu_custom_call.1
$region0: #{tpu_custom_call.1}
  #allocation0 [shape = 'u32[]', space=smem, size = 0x4, offset = 0x4, fixed_abs, tag = 'smem constant byte address 0x4 - core index']
  #allocation1 [shape = 'u32[144,128]{1,0:T(1,128)}', space=vmem, size = 0x12000, scoped, tag = 'internal scratch']
  %s0 = inlined_call_operand.hbm [shape: f32[10,8,32], index: 0, kind: input, shape index: {}]
  %s1 = inlined_call_operand.hbm [shape: f32[2,64,128], index: 1, kind: input, shape index: {}]
  %s2 = inlined_call_operand.vmem [shape: f32[2,1,128], index: 2, kind: input, shape index: {}]
  %s3 = inlined_call_operand.hbm [shape: f32[2,8,32], index: 3, kind: output, shape index: {0}]
  %s4 = inlined_call_operand.hbm [shape: f32[2,8,32], index: 4, kind: output, shape index: {1}]
  %5 = xla_tuple %s3, %s4
  %s6 = sld [smem:[#allocation0]]
  $region65: #{tpu_custom_call.1} parent=0
    _
  %s8 = ssub.s32 1, %s6
  %s9 = scalar_select 0, %s8, %s6
  $region1: #{tpu_custom_call.1} parent=0
    #allocation2 [shape = 'u8[8192]{0}', space=vmem, size = 0x2000, scoped, tag = 'input window, operand 0']
    #allocation3 [shape = 's32[2]{0}', space=sflag, size = 0x8, scoped, tag = 'scoped memory for tpu_custom_call.1']
    #allocation4 [shape = 's32[2]{0}', space=sflag, size = 0x8, scoped, tag = 'scoped memory for tpu_custom_call.1']
    #allocation5 [shape = 'u8[65536]{0}', space=vmem, size = 0x10000, scoped, tag = 'input window, operand 1, single buffered']
    #allocation6 [shape = 's32[1]{0}', space=sflag, size = 0x4, scoped, tag = 'scoped memory for tpu_custom_call.1']
    #allocation7 [shape = 'u8[8192]{0}', space=vmem, size = 0x2000, scoped, tag = 'output window, operand 0, single buffered']
    #allocation8 [shape = 'u8[8192]{0}', space=vmem, size = 0x2000, scoped, tag = 'output window, operand 1, single buffered']
    #allocation9 [shape = 's32[1]{0}', space=sflag, size = 0x4, scoped, tag = 'scoped memory for tpu_custom_call.1']
    %10 = vsyncpa [#allocation3], 0
    %s11 = scalar_lea.sflag [#allocation3], 1
    %12 = vsyncpa %s11, 0
    %13 = vsyncpa [#allocation6], 0
    %14 = vsyncpa [#allocation4], 0
    %15 = vsyncpa [#allocation9], 0
    loop: start=0, step=1, limit=12
    $region2: #{tpu_custom_call.1} parent=1 // loop_pre_header
      _
    $region3: #{tpu_custom_call.1} parent=1 // loop_header
      %s17 = sphi 0, %s21
      %p18 = scmp.ge.s32.totalorder %s17, 12
      %s27 = sphi 0, %s29
      %s30 = sphi 0, %s27
      %s31 = sphi 0, %s30
      %s47 = sphi 0, %s31
      %s51 = sphi 0, %s51
      %s53 = sphi 0, %s51
      %s54 = sphi 0, %s53
      %s68 = sphi 0, %s54
      %s72 = sphi 0, %s72
      %s74 = sphi 0, %s72
      %s75 = sphi 0, %s74
      %s89 = sphi 0, %s75
      %s93 = sphi 0, %s93
      %s95 = sphi 0, %s93
      %s96 = sphi 0, %s95
      %s110 = sphi 0, %s96
      %s114 = sphi 0, %s114
      %s116 = sphi 0, %s114
      %s117 = sphi 0, %s116
      %s131 = sphi 0, %s117
    $region4: #{tpu_custom_call.1} parent=1 // loop_header_branch
      %20 = sbr.rel (%p18) target = $region8
    $region5: #{tpu_custom_call.1} parent=1 // loop_body
      %s22 = ssub.s32 %s17, 1
      %s23 = ssub.s32 %s17, 2
      %s24 = sadd.s32 %s17, 1
      %s25 = ssub.s32 %s17, %s24
      %p26 = scmp.eq.s32.totalorder %s25, 0
      %s28 = sadd.s32 %s27, 1
      %s29 = scalar_select %p26, %s27, %s28
      %p32 = pneg %p26
      %p33 = scmp.eq.s32.totalorder %s17, 9
      %p34 = por %p32, %p33
      %p35 = scmp.ne.s32.totalorder %s27, %s30
      %p36 = scmp.eq.s32.totalorder %s17, 0
      %p37 = por %p35, %p36
      %p38 = scmp.ne.s32.totalorder %s27, %s30
      %p39 = scmp.eq.s32.totalorder %s22, 9
      %p40 = por %p38, %p39
      %p41 = scmp.ne.s32.totalorder %s30, %s31
      %p42 = scmp.eq.s32.totalorder %s22, 0
      %p43 = por %p41, %p42
      %p44 = scmp.ne.s32.totalorder %s30, %s31
      %p45 = scmp.eq.s32.totalorder %s23, 9
      %p46 = por %p44, %p45
      %p48 = scmp.ne.s32.totalorder %s31, %s47
      %p49 = scmp.eq.s32.totalorder %s23, 0
      %p50 = por %p48, %p49
      %s52 = sadd.s32 %s51, 1
      %p55 = scmp.eq.s32.totalorder %s17, 9
      %p56 = scmp.ne.s32.totalorder %s51, %s53
      %p57 = scmp.eq.s32.totalorder %s17, 0
      %p58 = por %p56, %p57
      %p59 = scmp.ne.s32.totalorder %s51, %s53
      %p60 = scmp.eq.s32.totalorder %s22, 9
      %p61 = por %p59, %p60
      %p62 = scmp.ne.s32.totalorder %s53, %s54
      %p63 = scmp.eq.s32.totalorder %s22, 0
      %p64 = por %p62, %p63
      %p65 = scmp.ne.s32.totalorder %s53, %s54
      %p66 = scmp.eq.s32.totalorder %s23, 9
      %p67 = por %p65, %p66
      %p69 = scmp.ne.s32.totalorder %s54, %s68
      %p70 = scmp.eq.s32.totalorder %s23, 0
      %p71 = por %p69, %p70
      %s73 = sadd.s32 %s72, 1
      %p76 = scmp.eq.s32.totalorder %s17, 9
      %p77 = scmp.ne.s32.totalorder %s72, %s74
      %p78 = scmp.eq.s32.totalorder %s17, 0
      %p79 = por %p77, %p78
      %p80 = scmp.ne.s32.totalorder %s72, %s74
      %p81 = scmp.eq.s32.totalorder %s22, 9
      %p82 = por %p80, %p81
      %p83 = scmp.ne.s32.totalorder %s74, %s75
      %p84 = scmp.eq.s32.totalorder %s22, 0
      %p85 = por %p83, %p84
      %p86 = scmp.ne.s32.totalorder %s74, %s75
      %p87 = scmp.eq.s32.totalorder %s23, 9
      %p88 = por %p86, %p87
      %p90 = scmp.ne.s32.totalorder %s75, %s89
      %p91 = scmp.eq.s32.totalorder %s23, 0
      %p92 = por %p90, %p91
      %s94 = sadd.s32 %s93, 1
      %p97 = scmp.eq.s32.totalorder %s17, 9
      %p98 = scmp.ne.s32.totalorder %s93, %s95
      %p99 = scmp.eq.s32.totalorder %s17, 0
      %p100 = por %p98, %p99
      %p101 = scmp.ne.s32.totalorder %s93, %s95
      %p102 = scmp.eq.s32.totalorder %s22, 9
      %p103 = por %p101, %p102
      %p104 = scmp.ne.s32.totalorder %s95, %s96
      %p105 = scmp.eq.s32.totalorder %s22, 0
      %p106 = por %p104, %p105
      %p107 = scmp.ne.s32.totalorder %s95, %s96
      %p108 = scmp.eq.s32.totalorder %s23, 9
      %p109 = por %p107, %p108
      %p111 = scmp.ne.s32.totalorder %s96, %s110
      %p112 = scmp.eq.s32.totalorder %s23, 0
      %p113 = por %p111, %p112
      %s115 = sadd.s32 %s114, 1
      %p118 = scmp.eq.s32.totalorder %s17, 9
      %p119 = scmp.ne.s32.totalorder %s114, %s116
      %p120 = scmp.eq.s32.totalorder %s17, 0
      %p121 = por %p119, %p120
      %p122 = scmp.ne.s32.totalorder %s114, %s116
      %p123 = scmp.eq.s32.totalorder %s22, 9
      %p124 = por %p122, %p123
      %p125 = scmp.ne.s32.totalorder %s116, %s117
      %p126 = scmp.eq.s32.totalorder %s22, 0
      %p127 = por %p125, %p126
      %p128 = scmp.ne.s32.totalorder %s116, %s117
      %p129 = scmp.eq.s32.totalorder %s23, 9
      %p130 = por %p128, %p129
      %p132 = scmp.ne.s32.totalorder %s117, %s131
      %p133 = scmp.eq.s32.totalorder %s23, 0
      %p134 = por %p132, %p133
      %p135 = scmp.le.s32.totalorder 1, %s17
      %p136 = scmp.lt.s32.totalorder %s17, 11
      %p137 = pnand %p135, %p136
      %p138 = pneg %p137
      // Predicated region
      $region9: #{tpu_custom_call.1} parent=5 // pred_check
        _
      $region10: #{tpu_custom_call.1} parent=5 // pred_check_branch
        %140 = sbr.rel (%p137) target = $region12
      $region11: #{tpu_custom_call.1} parent=5 // pred_region
        %s141 = ssub.s32 %s17, 1
        // Predicated region
        $region13: #{tpu_custom_call.1} parent=11 // pred_check
          %p142 = pneg %p64
        $region14: #{tpu_custom_call.1} parent=11 // pred_check_branch
          %144 = sbr.rel (%p142) target = $region16
        $region15: #{tpu_custom_call.1} parent=11 // pred_region
          %s146 = ssub.s32 2048, 2048
          %147 = vsyncadd [#allocation6], %s146
          %s148 = sshll.u32 [#allocation5], 4
          %s149 = int_to_ptr.vmem [resolvable:$true] %s148
          %154 = dma.hbm_to_vmem [thread:$0]  %s1, 2048, %s149, [#allocation6], 128, 128, 8
        $region16: #{tpu_custom_call.1} parent=11 // pred_fallthru
          _
        // Predicated region
        $region17: #{tpu_custom_call.1} parent=11 // pred_check
          %p155 = pneg %p85
        $region18: #{tpu_custom_call.1} parent=11 // pred_check_branch
          %157 = sbr.rel (%p155) target = $region20
        $region19: #{tpu_custom_call.1} parent=11 // pred_region
          _
        $region20: #{tpu_custom_call.1} parent=11 // pred_fallthru
          _
      $region12: #{tpu_custom_call.1} parent=5 // pred_fallthru
        _
      %p158 = scmp.lt.s32.totalorder %s17, 10
      // Predicated region
      $region21: #{tpu_custom_call.1} parent=5 // pred_check
        %p159 = pneg %p158
      $region22: #{tpu_custom_call.1} parent=5 // pred_check_branch
        %161 = sbr.rel (%p159) target = $region24
      $region23: #{tpu_custom_call.1} parent=5 // pred_region
        // Predicated region
        $region25: #{tpu_custom_call.1} parent=23 // pred_check
          %p162 = pneg %p37
        $region26: #{tpu_custom_call.1} parent=23 // pred_check_branch
          %164 = sbr.rel (%p162) target = $region28
        $region27: #{tpu_custom_call.1} parent=23 // pred_region
          %s165 = sand.u32 %s27, 1
          %s166 = scalar_lea.sflag [#allocation3], %s165
          %s167 = sand.u32 %s27, 1
          %s168 = smul.addr %s167, 8
          %s169 = scalar_lea.vmem [#allocation2], %s168
          %s171 = ssub.s32 128, 128
          %172 = vsyncadd %s166, %s171
          %s173 = smul.addr %s17, 128
          %s174 = scalar_lea.hbm %s0, %s173
          %s176 = sshll.u32 %s169, 4
          %s177 = int_to_ptr.vmem [resolvable:$true] %s176
          %179 = dma.hbm_to_vmem [thread:$0]  %s174, 128, %s177, %s166
        $region28: #{tpu_custom_call.1} parent=23 // pred_fallthru
          _
      $region24: #{tpu_custom_call.1} parent=5 // pred_fallthru
        _
      %p180 = scmp.le.s32.totalorder 1, %s17
      %p181 = scmp.lt.s32.totalorder %s17, 11
      %p182 = pnand %p180, %p181
      %p183 = pneg %p182
      // Predicated region
      $region29: #{tpu_custom_call.1} parent=5 // pred_check
        _
      $region30: #{tpu_custom_call.1} parent=5 // pred_check_branch
        %185 = sbr.rel (%p182) target = $region32
      $region31: #{tpu_custom_call.1} parent=5 // pred_region
        %s186 = ssub.s32 %s17, 1
        %s187 = sand.u32 %s30, 1
        %s188 = scalar_lea.sflag [#allocation3], %s187
        %s189 = sand.u32 %s30, 1
        %s190 = smul.addr %s189, 8
        %s191 = scalar_lea.vmem [#allocation2], %s190
        // Predicated region
        $region33: #{tpu_custom_call.1} parent=31 // pred_check
          %p192 = pneg %p43
        $region34: #{tpu_custom_call.1} parent=31 // pred_check_branch
          %194 = sbr.rel (%p192) target = $region36
        $region35: #{tpu_custom_call.1} parent=31 // pred_region
          %195 = dma.done %s188, 128
        $region36: #{tpu_custom_call.1} parent=31 // pred_fallthru
          _
        // Predicated region
        $region37: #{tpu_custom_call.1} parent=31 // pred_check
          %p196 = pneg %p64
        $region38: #{tpu_custom_call.1} parent=31 // pred_check_branch
          %198 = sbr.rel (%p196) target = $region40
        $region39: #{tpu_custom_call.1} parent=31 // pred_region
          %199 = dma.done [#allocation6], 2048
        $region40: #{tpu_custom_call.1} parent=31 // pred_fallthru
          _
        %s200 = sand.u32 %s30, 1
        %s201 = scalar_lea.sflag [#allocation3], %s200
        %s202 = sand.u32 %s30, 1
        %s203 = smul.addr %s202, 8
        %s204 = scalar_lea.vmem [#allocation2], %s203
        %p205 = pneg %p43
        %p206 = pneg %p40
        %p207 = pneg %p64
        %p208 = pneg %p61
        %p209 = pneg %p85
        %p210 = pneg %p82
        %p211 = pneg %p106
        %p212 = pneg %p103
        %p213 = pneg %p127
        %p214 = pneg %p124
        %p215 = scmp.eq.s32.totalorder %s22, 0
        // Predicated region
        $region41: #{tpu_custom_call.1} parent=31 // pred_check
          %p216 = pneg %p215
        $region42: #{tpu_custom_call.1} parent=31 // pred_check_branch
          %218 = sbr.rel (%p216) target = $region44
        $region43: #{tpu_custom_call.1} parent=31 // pred_region
          %vm219 = vcmask 261120
          %220 = vst.msk [vmem:[#allocation7] sm:$0xff] %vm219, 0.0
          %221 = vst.msk [vmem:[#allocation7 + $0x8] sm:$0xff] %vm219, 0.0
          %222 = vst.msk [vmem:[#allocation8] sm:$0xff] %vm219, 0.0
          %223 = vst.msk [vmem:[#allocation8 + $0x8] sm:$0xff] %vm219, 0.0
        $region44: #{tpu_custom_call.1} parent=31 // pred_fallthru
          _
        %v224 = vld [vmem:[%s191] sm:$0xff]
        %v225 = vlaneseq
        %v226 = vand.u32 %v225, 127
        %vm227 = vcmp.ge.s32.totalorder %v226, 64
        %vm228 = vcmp.lt.s32.totalorder %v226, 96
        %vm229 = vmand %vm227, %vm228
        %v230 = vld [vmem:[#allocation7] sm:$0xff]
        %v231 = vld [vmem:[#allocation8] sm:$0xff]
        %233 = vrot.lane.b32.xlu0 %v230, 32
        %v234 = vpop.permute.xlu0 %233
        %vm236 = vcmask 261120
        %v237 = vsel %vm236, %v224, %v234
        %v238 = vld [vmem:[#allocation5] sm:$0xff]
        %v239 = vld [vmem:[#allocation5 + $0x8] sm:$0xff]
        %v240 = vld [vmem:[#allocation5 + $0x10] sm:$0xff]
        %v241 = vld [vmem:[#allocation5 + $0x18] sm:$0xff]
        %v242 = vld [vmem:[#allocation5 + $0x20] sm:$0xff]
        %v243 = vld [vmem:[#allocation5 + $0x28] sm:$0xff]
        %v244 = vld [vmem:[#allocation5 + $0x30] sm:$0xff]
        %v245 = vld [vmem:[#allocation5 + $0x38] sm:$0xff]
        %v246 = vld [vmem:[%s2] sm:$0x1]
        %v248 = vlaneseq
        %v249 = vshrl.u32 %v248, 7
        %v250 = vsub.s32 0, %v249
        %v251 = vrot.slane %v246, %v250
        %vm253 = vcmask 523264
        %v255 = vsel %vm253, %v237, 0
        %257 = vmatprep.subr.mxu0 0.0
        %258 = vmatpush1.msra.mxu0 0.0
        %259 = vmatprep.subr.mxu0 0.0
        %260 = vmatpush1.msra.mxu0 0.0
        %261 = vmatprep.subr.mxu0 0.0
        %262 = vmatpush1.msra.mxu0 0.0
        %263 = vmatprep.subr.mxu0 0.0
        %264 = vmatpush1.msra.mxu0 0.0
        %265 = vmatprep.subr.mxu0 0.0
        %266 = vmatpush1.msra.mxu0 0.0
        %267 = vmatprep.subr.mxu0 0.0
        %268 = vmatpush1.msra.mxu0 0.0
        %269 = vmatprep.subr.mxu0 0.0
        %270 = vmatpush1.msra.mxu0 0.0
        %271 = vmatprep.subr.mxu0 0.0
        %272 = vmatpush1.msra.mxu0 0.0
        %273 = vmatprep.subr.mxu0 0.0
        %274 = vmatpush1.msra.mxu0 %v245
        %275 = vmatprep.subr.mxu0 0.0
        %276 = vmatpush1.msra.mxu0 %v244
        %277 = vmatprep.subr.mxu0 0.0
        %278 = vmatpush1.msra.mxu0 %v243
        %279 = vmatprep.subr.mxu0 0.0
        %280 = vmatpush1.msra.mxu0 %v242
        %281 = vmatprep.subr.mxu0 0.0
        %282 = vmatpush1.msra.mxu0 %v241
        %283 = vmatprep.subr.mxu0 0.0
        %284 = vmatpush1.msra.mxu0 %v240
        %285 = vmatprep.subr.mxu0 0.0
        %286 = vmatpush1.msra.mxu0 %v239
        %287 = vmatprep.subr.mxu0 0.0
        %288 = vmatpush1.msra.mxu0 %v238
        %289 = vmatprep.subr.mxu0 0.0
        %290 = vmatpush2.msra.mxu0 0.0
        %291 = vmatprep.subr.mxu0 0.0
        %292 = vmatpush2.msra.mxu0 0.0
        %293 = vmatprep.subr.mxu0 0.0
        %294 = vmatpush2.msra.mxu0 0.0
        %295 = vmatprep.subr.mxu0 0.0
        %296 = vmatpush2.msra.mxu0 0.0
        %297 = vmatprep.subr.mxu0 0.0
        %298 = vmatpush2.msra.mxu0 0.0
        %299 = vmatprep.subr.mxu0 0.0
        %300 = vmatpush2.msra.mxu0 0.0
        %301 = vmatprep.subr.mxu0 0.0
        %302 = vmatpush2.msra.mxu0 0.0
        %303 = vmatprep.subr.mxu0 0.0
        %304 = vmatpush2.msra.mxu0 0.0
        %305 = vmatprep.subr.mxu0 0.0
        %306 = vmatpush2.msra.mxu0 0.0
        %307 = vmatprep.subr.mxu0 0.0
        %308 = vmatpush2.msra.mxu0 0.0
        %309 = vmatprep.subr.mxu0 0.0
        %310 = vmatpush2.msra.mxu0 0.0
        %311 = vmatprep.subr.mxu0 0.0
        %312 = vmatpush2.msra.mxu0 0.0
        %313 = vmatprep.subr.mxu0 0.0
        %314 = vmatpush2.msra.mxu0 0.0
        %315 = vmatprep.subr.mxu0 0.0
        %316 = vmatpush2.msra.mxu0 0.0
        %317 = vmatprep.subr.mxu0 0.0
        %318 = vmatpush2.msra.mxu0 0.0
        %319 = vmatprep.subr.mxu0 0.0
        %320 = vmatpush2.msra.mxu0 0.0
        %321 = vmatprep.mubr.f32.mxu0 0.0
        %322 = vmatmul.mubr.f32.gmra.mxu0 %v255
        %v323 = vpop.f32.mrf.mxu0
        %v324 = vadd.f32 %v251, %v323
        %v325 = vpop.f32.mrf.mxu0
        %326 = vdwg.mxu0
        %v327 = vtanh.pop %v324
        %v328 = vxor.u32 %v324, 2147483648
        %v329 = vmul.f32 %v328, 1.442695
        %v330 = vpow.pop %v329
        %v331 = vadd.f32 %v330, 1.0
        %v332 = vrcp.pop %v331
        %v333 = vmul.f32 1.0, %v332
        %v334 = vsel %vm229, %v327, %v333
        %336 = vrot.lane.b32.xlu0 %v231, 32
        %v337 = vpop.permute.xlu0 %336
        %v339 = vmul.f32 %v334, %v337
        %341 = vrot.lane.b32.xlu0 %v334, 64
        %v342 = vpop.permute.xlu0 %341
        %v344 = vmul.f32 %v334, %v342
        %346 = vrot.lane.b32.xlu0 %v344, 32
        %v347 = vpop.permute.xlu0 %346
        %v349 = vadd.f32 %v339, %v347
        %v350 = vtanh.pop %v349
        %352 = vrot.lane.b32.xlu0 %v350, 64
        %v353 = vpop.permute.xlu0 %352
        %v355 = vmul.f32 %v334, %v353
        %357 = vrot.lane.b32.xlu0 %v355, 32
        %v358 = vpop.permute.xlu0 %357
        %360 = vst.msk [vmem:[#allocation7] sm:$0xff] %vm236, %v358
        %362 = vrot.lane.b32.xlu0 %v349, 96
        %v363 = vpop.permute.xlu0 %362
        %365 = vst.msk [vmem:[#allocation8] sm:$0xff] %vm236, %v363
        %s366 = scalar_lea.vmem [#allocation7], 8
        %v367 = vld [vmem:[%s366] sm:$0xff]
        %s368 = scalar_lea.vmem [#allocation8], 8
        %v369 = vld [vmem:[%s368] sm:$0xff]
        %371 = vrot.lane.b32.xlu0 %v367, 32
        %v372 = vpop.permute.xlu0 %371
        %v374 = vsel %vm236, %v358, %v372
        %s375 = scalar_lea.vmem [#allocation5], 64
        %v376 = vld [vmem:[%s375] sm:$0xff]
        %v377 = vld [vmem:[%s375 + $0x8] sm:$0xff]
        %v378 = vld [vmem:[%s375 + $0x10] sm:$0xff]
        %v379 = vld [vmem:[%s375 + $0x18] sm:$0xff]
        %v380 = vld [vmem:[%s375 + $0x20] sm:$0xff]
        %v381 = vld [vmem:[%s375 + $0x28] sm:$0xff]
        %v382 = vld [vmem:[%s375 + $0x30] sm:$0xff]
        %v383 = vld [vmem:[%s375 + $0x38] sm:$0xff]
        %s384 = scalar_lea.vmem %s2, 1
        %v385 = vld [vmem:[%s384] sm:$0x1]
        %v387 = vlaneseq
        %v388 = vshrl.u32 %v387, 7
        %v389 = vsub.s32 0, %v388
        %v390 = vrot.slane %v385, %v389
        %v393 = vsel %vm253, %v374, 0
        %395 = vmatprep.subr.mxu0 0.0
        %396 = vmatpush1.msra.mxu0 0.0
        %397 = vmatprep.subr.mxu0 0.0
        %398 = vmatpush1.msra.mxu0 0.0
        %399 = vmatprep.subr.mxu0 0.0
        %400 = vmatpush1.msra.mxu0 0.0
        %401 = vmatprep.subr.mxu0 0.0
        %402 = vmatpush1.msra.mxu0 0.0
        %403 = vmatprep.subr.mxu0 0.0
        %404 = vmatpush1.msra.mxu0 0.0
        %405 = vmatprep.subr.mxu0 0.0
        %406 = vmatpush1.msra.mxu0 0.0
        %407 = vmatprep.subr.mxu0 0.0
        %408 = vmatpush1.msra.mxu0 0.0
        %409 = vmatprep.subr.mxu0 0.0
        %410 = vmatpush1.msra.mxu0 0.0
        %411 = vmatprep.subr.mxu0 0.0
        %412 = vmatpush1.msra.mxu0 %v383
        %413 = vmatprep.subr.mxu0 0.0
        %414 = vmatpush1.msra.mxu0 %v382
        %415 = vmatprep.subr.mxu0 0.0
        %416 = vmatpush1.msra.mxu0 %v381
        %417 = vmatprep.subr.mxu0 0.0
        %418 = vmatpush1.msra.mxu0 %v380
        %419 = vmatprep.subr.mxu0 0.0
        %420 = vmatpush1.msra.mxu0 %v379
        %421 = vmatprep.subr.mxu0 0.0
        %422 = vmatpush1.msra.mxu0 %v378
        %423 = vmatprep.subr.mxu0 0.0
        %424 = vmatpush1.msra.mxu0 %v377
        %425 = vmatprep.subr.mxu0 0.0
        %426 = vmatpush1.msra.mxu0 %v376
        %427 = vmatprep.subr.mxu0 0.0
        %428 = vmatpush2.msra.mxu0 0.0
        %429 = vmatprep.subr.mxu0 0.0
        %430 = vmatpush2.msra.mxu0 0.0
        %431 = vmatprep.subr.mxu0 0.0
        %432 = vmatpush2.msra.mxu0 0.0
        %433 = vmatprep.subr.mxu0 0.0
        %434 = vmatpush2.msra.mxu0 0.0
        %435 = vmatprep.subr.mxu0 0.0
        %436 = vmatpush2.msra.mxu0 0.0
        %437 = vmatprep.subr.mxu0 0.0
        %438 = vmatpush2.msra.mxu0 0.0
        %439 = vmatprep.subr.mxu0 0.0
        %440 = vmatpush2.msra.mxu0 0.0
        %441 = vmatprep.subr.mxu0 0.0
        %442 = vmatpush2.msra.mxu0 0.0
        %443 = vmatprep.subr.mxu0 0.0
        %444 = vmatpush2.msra.mxu0 0.0
        %445 = vmatprep.subr.mxu0 0.0
        %446 = vmatpush2.msra.mxu0 0.0
        %447 = vmatprep.subr.mxu0 0.0
        %448 = vmatpush2.msra.mxu0 0.0
        %449 = vmatprep.subr.mxu0 0.0
        %450 = vmatpush2.msra.mxu0 0.0
        %451 = vmatprep.subr.mxu0 0.0
        %452 = vmatpush2.msra.mxu0 0.0
        %453 = vmatprep.subr.mxu0 0.0
        %454 = vmatpush2.msra.mxu0 0.0
        %455 = vmatprep.subr.mxu0 0.0
        %456 = vmatpush2.msra.mxu0 0.0
        %457 = vmatprep.subr.mxu0 0.0
        %458 = vmatpush2.msra.mxu0 0.0
        %459 = vmatprep.mubr.f32.mxu0 0.0
        %460 = vmatmul.mubr.f32.gmra.mxu0 %v393
        %v461 = vpop.f32.mrf.mxu0
        %v462 = vadd.f32 %v390, %v461
        %v463 = vpop.f32.mrf.mxu0
        %464 = vdwg.mxu0
        %v465 = vtanh.pop %v462
        %v466 = vxor.u32 %v462, 2147483648
        %v467 = vmul.f32 %v466, 1.442695
        %v468 = vpow.pop %v467
        %v469 = vadd.f32 %v468, 1.0
        %v470 = vrcp.pop %v469
        %v471 = vmul.f32 1.0, %v470
        %v472 = vsel %vm229, %v465, %v471
        %474 = vrot.lane.b32.xlu0 %v369, 32
        %v475 = vpop.permute.xlu0 %474
        %v477 = vmul.f32 %v472, %v475
        %479 = vrot.lane.b32.xlu0 %v472, 64
        %v480 = vpop.permute.xlu0 %479
        %v482 = vmul.f32 %v472, %v480
        %484 = vrot.lane.b32.xlu0 %v482, 32
        %v485 = vpop.permute.xlu0 %484
        %v487 = vadd.f32 %v477, %v485
        %v488 = vtanh.pop %v487
        %490 = vrot.lane.b32.xlu0 %v488, 64
        %v491 = vpop.permute.xlu0 %490
        %v493 = vmul.f32 %v472, %v491
        %495 = vrot.lane.b32.xlu0 %v493, 32
        %v496 = vpop.permute.xlu0 %495
        %498 = vst.msk [vmem:[%s366] sm:$0xff] %vm236, %v496
        %500 = vrot.lane.b32.xlu0 %v487, 96
        %v501 = vpop.permute.xlu0 %500
        %503 = vst.msk [vmem:[%s368] sm:$0xff] %vm236, %v501
        // Predicated region
        $region45: #{tpu_custom_call.1} parent=31 // pred_check
          %p504 = pneg %p103
        $region46: #{tpu_custom_call.1} parent=31 // pred_check_branch
          %506 = sbr.rel (%p504) target = $region48
        $region47: #{tpu_custom_call.1} parent=31 // pred_region
          %s508 = ssub.s32 256, 256
          %509 = vsyncadd [#allocation4], %s508
          %s510 = sshll.u32 [#allocation7], 4
          %s511 = int_to_ptr.vmem [resolvable:$true] %s510
          %516 = dma.vmem_to_hbm [thread:$0]  %s511, 256, %s3, [#allocation4], 128, 128, 8
        $region48: #{tpu_custom_call.1} parent=31 // pred_fallthru
          _
        // Predicated region
        $region49: #{tpu_custom_call.1} parent=31 // pred_check
          %p517 = pneg %p124
        $region50: #{tpu_custom_call.1} parent=31 // pred_check_branch
          %519 = sbr.rel (%p517) target = $region52
        $region51: #{tpu_custom_call.1} parent=31 // pred_region
          %s521 = ssub.s32 256, 256
          %522 = vsyncadd [#allocation9], %s521
          %s523 = sshll.u32 [#allocation8], 4
          %s524 = int_to_ptr.vmem [resolvable:$true] %s523
          %529 = dma.vmem_to_hbm [thread:$0]  %s524, 256, %s4, [#allocation9], 128, 128, 8
        $region52: #{tpu_custom_call.1} parent=31 // pred_fallthru
          _
        // Predicated region
        $region53: #{tpu_custom_call.1} parent=31 // pred_check
          %p530 = pneg %p103
        $region54: #{tpu_custom_call.1} parent=31 // pred_check_branch
          %532 = sbr.rel (%p530) target = $region56
        $region55: #{tpu_custom_call.1} parent=31 // pred_region
          %533 = dma.done [#allocation4], 256
        $region56: #{tpu_custom_call.1} parent=31 // pred_fallthru
          _
        // Predicated region
        $region57: #{tpu_custom_call.1} parent=31 // pred_check
          %p534 = pneg %p124
        $region58: #{tpu_custom_call.1} parent=31 // pred_check_branch
          %536 = sbr.rel (%p534) target = $region60
        $region59: #{tpu_custom_call.1} parent=31 // pred_region
          %537 = dma.done [#allocation9], 256
        $region60: #{tpu_custom_call.1} parent=31 // pred_fallthru
          _
      $region32: #{tpu_custom_call.1} parent=5 // pred_fallthru
        _
      %p538 = scmp.le.s32.totalorder 2, %s17
      // Predicated region
      $region61: #{tpu_custom_call.1} parent=5 // pred_check
        %p539 = pneg %p538
      $region62: #{tpu_custom_call.1} parent=5 // pred_check_branch
        %541 = sbr.rel (%p539) target = $region64
      $region63: #{tpu_custom_call.1} parent=5 // pred_region
        %s542 = ssub.s32 %s17, 2
      $region64: #{tpu_custom_call.1} parent=5 // pred_fallthru
        _
    $region6: #{tpu_custom_call.1} parent=1 // loop_footer
      %s21 = sadd.s32 1, %s17
    $region7: #{tpu_custom_call.1} parent=1 // loop_footer_branch
      %16 = sbr.rel target = $region3
    $region8: #{tpu_custom_call.1} parent=1 // loop_exit
      _
    %543 = vsyncpa [#allocation3], 1
    %s544 = scalar_lea.sflag [#allocation3], 1
    %545 = vsyncpa %s544, 1
    %546 = vsyncpa [#allocation6], 1
    %547 = vsyncpa [#allocation4], 1
    %s548 = scalar_lea.sflag [#allocation4], 1
    %549 = vsyncpa %s548, 1
    %550 = vsyncpa [#allocation9], 1

</llo_original>
